<compile_context>
chip_gen: v7x
topology: tpu7x:2x2x1
jax: 0.10.0
libtpu: 0.0.40
codegen_flags: <defaults>
</compile_context>

<pallas_src>
import jax
import jax.numpy as jnp
from jax import lax
from jax.experimental import pallas as pl
from jax.experimental.pallas import tpu as pltpu

HEAD_CH = 8   # model head: 1 heatmap + 2 offset + 4 regression + 1 extra
OUT_CH = 7    # wrapper output rows: [hm, reg0..3, off0, off1]
# model-channel -> kernel-row permutation; row 7 (`extra`) is computed only to
# keep the matmul M-dim at 8 sublanes and is never stored to HBM.
_PERM = (0, 3, 4, 5, 6, 1, 2, 7)


def _head_kernel(x_ref, w_ref, b_ref, o_ref):
    # x_ref: (C, tn)  w_ref: (8, C)  b_ref: (8, 1)  o_ref: (OUT_CH, tn)
    y = jnp.dot(w_ref[...], x_ref[...], preferred_element_type=jnp.float32)
    y = y + b_ref[...]
    o_ref[...] = y[:OUT_CH, :].astype(o_ref.dtype)
    # sigmoid only on the heatmap row (row 0 of the already-permuted head)
    o_ref[0:1, :] = jax.nn.sigmoid(y[0:1, :]).astype(o_ref.dtype)


def _pick_tile(C, N):
    """Choose lane tile tn (multiple of 128) and padded spatial size."""
    c_pad = ((C + 7) // 8) * 8
    # double-buffered in+out blocks kept well under v5e's 16 MiB scoped default
    budget_bytes = 8 * 1024 * 1024
    cap = budget_bytes // (4 * 2 * (c_pad + 8))
    cap = min(8192, max(128, (cap // 128) * 128))
    if N % 128 == 0:
        # largest multiple-of-128 divisor of N not exceeding cap -> no padding
        best, d = 128, 128
        while d <= min(N, cap):
            if N % d == 0:
                best = d
            d += 128
        return best, N
    tn = min(cap, ((N + 127) // 128) * 128)
    n_pad = ((N + tn - 1) // tn) * tn
    return tn, n_pad


def _run_head(x, w8, b8, *, tn):
    B, C, n_pad = x.shape
    n_tiles = n_pad // tn
    return pl.pallas_call(
        _head_kernel,
        out_shape=jax.ShapeDtypeStruct((OUT_CH, B * n_pad), jnp.float32),
        grid_spec=pltpu.PrefetchScalarGridSpec(
            num_scalar_prefetch=0,
            grid=(B, n_tiles),
            in_specs=[
                pl.BlockSpec((None, C, tn), lambda b, j: (b, 0, j)),
                pl.BlockSpec((HEAD_CH, C), lambda b, j: (0, 0)),
                pl.BlockSpec((HEAD_CH, 1), lambda b, j: (0, 0)),
            ],
            out_specs=pl.BlockSpec((OUT_CH, tn),
                                   lambda b, j: (0, b * n_tiles + j)),
        ),
        compiler_params=pltpu.CompilerParams(
            dimension_semantics=("parallel", "parallel"),
        ),
    )(x, w8, b8)


@jax.jit
def wrapper_forward(inp, w, b):
    """Replicates Wrapper.forward. inp: (B, C, H, W) float32 -> (7, B, H*W)."""
    B, C, H, W = inp.shape
    N = H * W

    # NCHW -> (B, C, N): contiguous reshape, no transpose.
    x = inp.reshape(B, C, N)

    # Permute head channels into final decode order so the kernel writes rows
    # already in output order (extra channel dropped from the HBM output).
    perm = list(_PERM)
    w8 = jnp.transpose(w[:, perm], (1, 0))          # (8, C)
    b8 = jnp.transpose(b[:, perm], (1, 0))          # (8, 1)

    tn, n_pad = _pick_tile(C, N)
    if n_pad != N:
        x = jnp.pad(x, ((0, 0), (0, 0), (0, n_pad - N)))

    out = _run_head(x, w8, b8, tn=tn)               # (7, B*n_pad), lane-dense
    out = out.reshape(OUT_CH, B, n_pad)             # free reshape
    if n_pad != N:
        out = out[:, :, :N]
    return out                                      # == torch.stack(decode)


if __name__ == "__main__":
    key = jax.random.PRNGKey(0)
    k_in, k_w, k_b = jax.random.split(key, 3)

    B, C, H, W = 2, 4, 16, 16
    inp = jax.random.normal(k_in, (B, C, H, W), dtype=jnp.float32)

    # deterministic synthetic 1x1-conv head parameters
    w = jax.random.normal(k_w, (C, HEAD_CH), dtype=jnp.float32) * 0.1
    b = jax.random.normal(k_b, (1, HEAD_CH), dtype=jnp.float32) * 0.1

    out = jax.block_until_ready(wrapper_forward(inp, w, b))
    assert out.shape == (7, B, H * W), out.shape

    # pure-JAX reference of Wrapper.forward over the same synthetic head
    x2d = jnp.transpose(inp, (0, 2, 3, 1)).reshape(B * H * W, C)
    heads = (jnp.dot(x2d, w, precision=lax.Precision.HIGHEST) + b)
    heads = heads.reshape(B, H * W, HEAD_CH)
    ref = jnp.stack([
        jax.nn.sigmoid(heads[..., 0]),
        heads[..., 3], heads[..., 4], heads[..., 5], heads[..., 6],
        heads[..., 1], heads[..., 2],
    ])
    assert jnp.allclose(out, ref, atol=1e-2, rtol=1e-2), \
        float(jnp.max(jnp.abs(out - ref)))

    print("KERNEL_OK")
</pallas_src>

<mosaic_0001>
module attributes {stable_mosaic.version = 11 : i64} {
  func.func @_head_kernel(%arg0: i32, %arg1: i32, %arg2: memref<1x4x256xf32, #tpu.memory_space<vmem>>, %arg3: memref<8x4xf32, #tpu.memory_space<vmem>>, %arg4: memref<8x1xf32, #tpu.memory_space<vmem>>, %arg5: memref<7x256xf32, #tpu.memory_space<vmem>>) attributes {dimension_semantics = [#tpu.dimension_semantics<parallel>, #tpu.dimension_semantics<parallel>], iteration_bounds = array<i64: 2, 1>, scalar_prefetch = 0 : i64, scratch_operands = 0 : i64, tpu.core_type = #tpu.core_type<tc>, window_params = [{transform_indices = @transform_0, window_bounds = array<i64: 1, 4, 256>}, {pipeline_mode = #tpu.pipeline_mode<synchronous>, transform_indices = @transform_1, window_bounds = array<i64: 8, 4>}, {pipeline_mode = #tpu.pipeline_mode<synchronous>, transform_indices = @transform_2, window_bounds = array<i64: 8, 1>}, {transform_indices = @transform_3, window_bounds = array<i64: 7, 256>}]} {
    %c0 = arith.constant 0 : index
    %c0_0 = arith.constant 0 : index
    %0 = vector.load %arg3[%c0, %c0_0] : memref<8x4xf32, #tpu.memory_space<vmem>>, vector<8x4xf32>
    %c0_1 = arith.constant 0 : index
    %c0_2 = arith.constant 0 : index
    %c0_3 = arith.constant 0 : index
    %1 = vector.load %arg2[%c0_1, %c0_2, %c0_3] : memref<1x4x256xf32, #tpu.memory_space<vmem>>, vector<1x4x256xf32>
    %2 = vector.shape_cast %1 : vector<1x4x256xf32> to vector<4x256xf32>
    %cst = arith.constant dense<0.000000e+00> : vector<8x256xf32>
    %3 = tpu.matmul %0, %2, %cst {dimension_numbers = #tpu.dot_dimension_numbers<[1], [0], [0], [1], [0, 0, 1, 1], [], []>} : vector<8x4xf32>, vector<4x256xf32>, vector<8x256xf32> -> vector<8x256xf32>
    %c0_4 = arith.constant 0 : index
    %c0_5 = arith.constant 0 : index
    %4 = vector.load %arg4[%c0_4, %c0_5] : memref<8x1xf32, #tpu.memory_space<vmem>>, vector<8x1xf32>
    %5 = vector.broadcast %4 : vector<8x1xf32> to vector<8x256xf32>
    %6 = arith.addf %3, %5 : vector<8x256xf32>
    %7 = vector.extract_strided_slice %6 {offsets = [0, 0], sizes = [7, 256], strides = [1, 1]} : vector<8x256xf32> to vector<7x256xf32>
    %c0_6 = arith.constant 0 : index
    %c0_7 = arith.constant 0 : index
    %8 = vector.load %arg5[%c0_6, %c0_7] : memref<7x256xf32, #tpu.memory_space<vmem>>, vector<7x256xf32>
    tpu.vector_store %arg5[%c0_6, %c0_7], %7 {strides = array<i32>} : memref<7x256xf32, #tpu.memory_space<vmem>>, vector<7x256xf32>,
    %9 = vector.extract_strided_slice %6 {offsets = [0, 0], sizes = [1, 256], strides = [1, 1]} : vector<8x256xf32> to vector<1x256xf32>
    %10 = arith.negf %9 : vector<1x256xf32>
    %11 = math.exp %10 : vector<1x256xf32>
    %cst_8 = arith.constant 1.000000e+00 : f32
    %12 = vector.broadcast %cst_8 : f32 to vector<1x256xf32>
    %13 = arith.addf %12, %11 : vector<1x256xf32>
    %14 = arith.divf %12, %13 : vector<1x256xf32>
    %c0_9 = arith.constant 0 : index
    %c0_10 = arith.constant 0 : index
    %15 = vector.load %arg5[%c0_9, %c0_10] : memref<7x256xf32, #tpu.memory_space<vmem>>, vector<1x256xf32>
    tpu.vector_store %arg5[%c0_9, %c0_10], %14 {strides = array<i32>} : memref<7x256xf32, #tpu.memory_space<vmem>>, vector<1x256xf32>,
    return
  }
  func.func @transform_0(%arg0: i32, %arg1: i32) -> (i32, i32, i32) {
    %c0_i32 = arith.constant 0 : i32
    %c0_i32_0 = arith.constant 0 : i32
    return %arg0, %c0_i32, %arg1 : i32, i32, i32
  }
  func.func @transform_1(%arg0: i32, %arg1: i32) -> (i32, i32) {
    %c0_i32 = arith.constant 0 : i32
    %c0_i32_0 = arith.constant 0 : i32
    %c0_i32_1 = arith.constant 0 : i32
    return %c0_i32, %c0_i32_0 : i32, i32
  }
  func.func @transform_2(%arg0: i32, %arg1: i32) -> (i32, i32) {
    %c0_i32 = arith.constant 0 : i32
    %c0_i32_0 = arith.constant 0 : i32
    %c0_i32_1 = arith.constant 0 : i32
    return %c0_i32, %c0_i32_0 : i32, i32
  }
  func.func @transform_3(%arg0: i32, %arg1: i32) -> (i32, i32) {
    %c1_i32 = arith.constant 1 : i32
    %0 = arith.muli %arg0, %c1_i32 : i32
    %1 = arith.addi %0, %arg1 : i32
    %c0_i32 = arith.constant 0 : i32
    %c0_i32_0 = arith.constant 0 : i32
    return %c0_i32, %1 : i32, i32
  }
}

</mosaic_0001>

<llo_original>
// kernel: wrapper_forward.1
$region0: #{wrapper_forward.1}
  #allocation0 [shape = 'u32[]', space=smem, size = 0x4, offset = 0x4, fixed_abs, tag = 'smem constant byte address 0x4 - core index']
  #allocation1 [shape = 'u32[144,128]{1,0:T(1,128)}', space=vmem, size = 0x12000, scoped, tag = 'internal scratch']
  %s0 = inlined_call_operand.vmem [shape: f32[2,4,256], index: 0, kind: input, shape index: {}]
  %s1 = inlined_call_operand.vmem [shape: f32[8,4], index: 1, kind: input, shape index: {}]
  %s2 = inlined_call_operand.vmem [shape: f32[8,1], index: 2, kind: input, shape index: {}]
  %s3 = inlined_call_operand.vmem [shape: f32[7,512], index: 3, kind: output, shape index: {}]
  %s4 = sld [smem:[#allocation0]]
  $region45: #{wrapper_forward.1} parent=0
    _
  %s6 = ssub.s32 1, %s4
  %s7 = scalar_select 0, %s6, %s4
  loop: start=0, step=1, limit=4
  $region2: #{wrapper_forward.1} parent=0 // loop_pre_header
    _
  $region3: #{wrapper_forward.1} parent=0 // loop_header
    %s9 = sphi 0, %s13
    %p10 = scmp.ge.s32.totalorder %s9, 4
    %s16 = sphi 0, %s28
    %s17 = sphi 0, %s24
    %s18 = sphi 0, %s16
    %s19 = sphi 0, %s17
    %s20 = sphi 0, %s18
    %s21 = sphi 0, %s19
    %s33 = sphi 0, %s35
    %s36 = sphi 0, %s33
    %s37 = sphi 0, %s36
    %s53 = sphi 0, %s37
    %s57 = sphi 0, %s57
    %s59 = sphi 0, %s57
    %s60 = sphi 0, %s59
    %s74 = sphi 0, %s60
    %s78 = sphi 0, %s78
    %s80 = sphi 0, %s78
    %s81 = sphi 0, %s80
    %s95 = sphi 0, %s81
    %s103 = sphi 0, %s105
    %s106 = sphi 0, %s103
    %s107 = sphi 0, %s106
    %s123 = sphi 0, %s107
  $region4: #{wrapper_forward.1} parent=0 // loop_header_branch
    %12 = sbr.rel (%p10) target = $region8
  $region5: #{wrapper_forward.1} parent=0 // loop_body
    %s14 = ssub.s32 %s9, 1
    %s15 = ssub.s32 %s9, 2
    %s22 = sadd.s32 1, %s17
    %p23 = scmp.ge.s32.totalorder %s22, 1
    %s24 = scalar_select %p23, 0, %s22
    %s25 = sadd.s32 1, %s16
    %s26 = scalar_select %p23, %s25, %s16
    %p27 = scmp.ge.s32.totalorder %s26, 2
    %s28 = scalar_select %p27, 0, %s26
    %s29 = ssub.s32 %s16, %s28
    %s30 = ssub.s32 %s17, %s24
    %s31 = sor.u32 %s29, %s30
    %p32 = scmp.eq.s32.totalorder %s31, 0
    %s34 = sadd.s32 %s33, 1
    %s35 = scalar_select %p32, %s33, %s34
    %p38 = pneg %p32
    %p39 = scmp.eq.s32.totalorder %s9, 1
    %p40 = por %p38, %p39
    %p41 = scmp.ne.s32.totalorder %s33, %s36
    %p42 = scmp.eq.s32.totalorder %s9, 0
    %p43 = por %p41, %p42
    %p44 = scmp.ne.s32.totalorder %s33, %s36
    %p45 = scmp.eq.s32.totalorder %s14, 1
    %p46 = por %p44, %p45
    %p47 = scmp.ne.s32.totalorder %s36, %s37
    %p48 = scmp.eq.s32.totalorder %s14, 0
    %p49 = por %p47, %p48
    %p50 = scmp.ne.s32.totalorder %s36, %s37
    %p51 = scmp.eq.s32.totalorder %s15, 1
    %p52 = por %p50, %p51
    %p54 = scmp.ne.s32.totalorder %s37, %s53
    %p55 = scmp.eq.s32.totalorder %s15, 0
    %p56 = por %p54, %p55
    %s58 = sadd.s32 %s57, 1
    %p61 = scmp.eq.s32.totalorder %s9, 1
    %p62 = scmp.ne.s32.totalorder %s57, %s59
    %p63 = scmp.eq.s32.totalorder %s9, 0
    %p64 = por %p62, %p63
    %p65 = scmp.ne.s32.totalorder %s57, %s59
    %p66 = scmp.eq.s32.totalorder %s14, 1
    %p67 = por %p65, %p66
    %p68 = scmp.ne.s32.totalorder %s59, %s60
    %p69 = scmp.eq.s32.totalorder %s14, 0
    %p70 = por %p68, %p69
    %p71 = scmp.ne.s32.totalorder %s59, %s60
    %p72 = scmp.eq.s32.totalorder %s15, 1
    %p73 = por %p71, %p72
    %p75 = scmp.ne.s32.totalorder %s60, %s74
    %p76 = scmp.eq.s32.totalorder %s15, 0
    %p77 = por %p75, %p76
    %s79 = sadd.s32 %s78, 1
    %p82 = scmp.eq.s32.totalorder %s9, 1
    %p83 = scmp.ne.s32.totalorder %s78, %s80
    %p84 = scmp.eq.s32.totalorder %s9, 0
    %p85 = por %p83, %p84
    %p86 = scmp.ne.s32.totalorder %s78, %s80
    %p87 = scmp.eq.s32.totalorder %s14, 1
    %p88 = por %p86, %p87
    %p89 = scmp.ne.s32.totalorder %s80, %s81
    %p90 = scmp.eq.s32.totalorder %s14, 0
    %p91 = por %p89, %p90
    %p92 = scmp.ne.s32.totalorder %s80, %s81
    %p93 = scmp.eq.s32.totalorder %s15, 1
    %p94 = por %p92, %p93
    %p96 = scmp.ne.s32.totalorder %s81, %s95
    %p97 = scmp.eq.s32.totalorder %s15, 0
    %p98 = por %p96, %p97
    %s99 = sadd.s32 %s16, %s17
    %s100 = sadd.s32 %s28, %s24
    %s101 = ssub.s32 %s99, %s100
    %p102 = scmp.eq.s32.totalorder %s101, 0
    %s104 = sadd.s32 %s103, 1
    %s105 = scalar_select %p102, %s103, %s104
    %p108 = pneg %p102
    %p109 = scmp.eq.s32.totalorder %s9, 1
    %p110 = por %p108, %p109
    %p111 = scmp.ne.s32.totalorder %s103, %s106
    %p112 = scmp.eq.s32.totalorder %s9, 0
    %p113 = por %p111, %p112
    %p114 = scmp.ne.s32.totalorder %s103, %s106
    %p115 = scmp.eq.s32.totalorder %s14, 1
    %p116 = por %p114, %p115
    %p117 = scmp.ne.s32.totalorder %s106, %s107
    %p118 = scmp.eq.s32.totalorder %s14, 0
    %p119 = por %p117, %p118
    %p120 = scmp.ne.s32.totalorder %s106, %s107
    %p121 = scmp.eq.s32.totalorder %s15, 1
    %p122 = por %p120, %p121
    %p124 = scmp.ne.s32.totalorder %s107, %s123
    %p125 = scmp.eq.s32.totalorder %s15, 0
    %p126 = por %p124, %p125
    %p127 = scmp.le.s32.totalorder 1, %s9
    %p128 = scmp.lt.s32.totalorder %s9, 3
    %p129 = pnand %p127, %p128
    %p130 = pneg %p129
    // Predicated region
    $region9: #{wrapper_forward.1} parent=5 // pred_check
      _
    $region10: #{wrapper_forward.1} parent=5 // pred_check_branch
      %132 = sbr.rel (%p129) target = $region12
    $region11: #{wrapper_forward.1} parent=5 // pred_region
      %s133 = ssub.s32 %s9, 1
      // Predicated region
      $region13: #{wrapper_forward.1} parent=11 // pred_check
        %p134 = pneg %p70
      $region14: #{wrapper_forward.1} parent=11 // pred_check_branch
        %136 = sbr.rel (%p134) target = $region16
      $region15: #{wrapper_forward.1} parent=11 // pred_region
        _
      $region16: #{wrapper_forward.1} parent=11 // pred_fallthru
        _
      // Predicated region
      $region17: #{wrapper_forward.1} parent=11 // pred_check
        %p137 = pneg %p91
      $region18: #{wrapper_forward.1} parent=11 // pred_check_branch
        %139 = sbr.rel (%p137) target = $region20
      $region19: #{wrapper_forward.1} parent=11 // pred_region
        _
      $region20: #{wrapper_forward.1} parent=11 // pred_fallthru
        _
    $region12: #{wrapper_forward.1} parent=5 // pred_fallthru
      _
    %p140 = scmp.lt.s32.totalorder %s9, 2
    // Predicated region
    $region21: #{wrapper_forward.1} parent=5 // pred_check
      %p141 = pneg %p140
    $region22: #{wrapper_forward.1} parent=5 // pred_check_branch
      %143 = sbr.rel (%p141) target = $region24
    $region23: #{wrapper_forward.1} parent=5 // pred_region
      // Predicated region
      $region25: #{wrapper_forward.1} parent=23 // pred_check
        %p144 = pneg %p43
      $region26: #{wrapper_forward.1} parent=23 // pred_check_branch
        %146 = sbr.rel (%p144) target = $region28
      $region27: #{wrapper_forward.1} parent=23 // pred_region
        %s147 = smul.u32 2, %s17
        %p148 = scmp.lt.s32.totalorder %s16, 1
        %s149 = scalar_select %p148, %s16, 1
        %p150 = scmp.lt.s32.totalorder %s147, 1
        %s151 = scalar_select %p150, %s147, 1
        %s152 = smul.addr %s149, 2
        %s153 = sadd.s32 %s151, %s152
        %s154 = smul.addr %s153, 4
        %s155 = scalar_lea.vmem %s0, %s154
        %s156 = smul.u32 2, %s17
      $region28: #{wrapper_forward.1} parent=23 // pred_fallthru
        _
    $region24: #{wrapper_forward.1} parent=5 // pred_fallthru
      _
    %p157 = scmp.le.s32.totalorder 1, %s9
    %p158 = scmp.lt.s32.totalorder %s9, 3
    %p159 = pnand %p157, %p158
    %p160 = pneg %p159
    // Predicated region
    $region29: #{wrapper_forward.1} parent=5 // pred_check
      _
    $region30: #{wrapper_forward.1} parent=5 // pred_check_branch
      %162 = sbr.rel (%p159) target = $region32
    $region31: #{wrapper_forward.1} parent=5 // pred_region
      %s163 = ssub.s32 %s9, 1
      %s164 = smul.u32 2, %s19
      %p165 = scmp.lt.s32.totalorder %s18, 1
      %s166 = scalar_select %p165, %s18, 1
      %p167 = scmp.lt.s32.totalorder %s164, 1
      %s168 = scalar_select %p167, %s164, 1
      %s169 = smul.addr %s166, 2
      %s170 = sadd.s32 %s168, %s169
      %s171 = smul.addr %s170, 4
      %s172 = scalar_lea.vmem %s0, %s171
      %p173 = pneg %p49
      %p174 = pneg %p46
      %p175 = pneg %p70
      %p176 = pneg %p67
      %p177 = pneg %p91
      %p178 = pneg %p88
      %p179 = pneg %p119
      %p180 = pneg %p116
      %s181 = sadd.s32 %s18, %s19
      %s182 = smul.u32 2, %s181
      %p183 = scmp.lt.s32.totalorder %s182, 3
      %s184 = scalar_select %p183, %s182, 3
      %s185 = smul.addr %s184, 8
      %s186 = scalar_lea.vmem %s3, %s185
      %s187 = smul.u32 2, %s19
      %p188 = scmp.lt.s32.totalorder %s18, 1
      %s189 = scalar_select %p188, %s18, 1
      %p190 = scmp.lt.s32.totalorder %s187, 1
      %s191 = scalar_select %p190, %s187, 1
      %s192 = smul.addr %s189, 2
      %s193 = sadd.s32 %s191, %s192
      %s194 = smul.addr %s193, 4
      %s195 = scalar_lea.vmem %s0, %s194
      %s196 = smul.u32 2, %s19
      %s197 = sadd.s32 %s18, %s19
      %s198 = smul.u32 2, %s197
      %p199 = scmp.lt.s32.totalorder %s198, 3
      %s200 = scalar_select %p199, %s198, 3
      %s201 = smul.addr %s200, 8
      %s202 = scalar_lea.vmem %s3, %s201
      %s203 = sadd.s32 %s18, %s19
      %s204 = smul.u32 2, %s203
      %v205 = vld [vmem:[%s1] sm:$0xff]
      %v206 = vld [vmem:[%s195] sm:$0xff]
      %v207 = vld [vmem:[%s2] sm:$0xff]
      %209 = vset.pattern.permute.xlu0 0
      %210 = vperm.xlu0 %209, %v207
      %v211 = vpop.permute.xlu0 %210
      %v214 = vcombine.high %v206, %v206
      %vm215 = vcmask 31744
      %v217 = vsel %vm215, %v205, 0
      %vm219 = vcmask 1043456
      %v220 = vsel %vm219, %v206, 0
      %v222 = vsel %vm219, %v214, 0
      %224 = vmatprep.subr.mxu0 %v222
      %225 = vmatpush1.msra.mxu0 %v220
      %226 = vmatprep.subr.mxu0 0.0
      %227 = vmatpush1.msra.mxu0 0.0
      %228 = vmatprep.subr.mxu0 0.0
      %229 = vmatpush1.msra.mxu0 0.0
      %230 = vmatprep.subr.mxu0 0.0
      %231 = vmatpush1.msra.mxu0 0.0
      %232 = vmatprep.subr.mxu0 0.0
      %233 = vmatpush1.msra.mxu0 0.0
      %234 = vmatprep.subr.mxu0 0.0
      %235 = vmatpush1.msra.mxu0 0.0
      %236 = vmatprep.subr.mxu0 0.0
      %237 = vmatpush1.msra.mxu0 0.0
      %238 = vmatprep.subr.mxu0 0.0
      %239 = vmatpush1.msra.mxu0 0.0
      %240 = vmatprep.subr.mxu0 0.0
      %241 = vmatpush1.msra.mxu0 0.0
      %242 = vmatprep.subr.mxu0 0.0
      %243 = vmatpush1.msra.mxu0 0.0
      %244 = vmatprep.subr.mxu0 0.0
      %245 = vmatpush1.msra.mxu0 0.0
      %246 = vmatprep.subr.mxu0 0.0
      %247 = vmatpush1.msra.mxu0 0.0
      %248 = vmatprep.subr.mxu0 0.0
      %249 = vmatpush1.msra.mxu0 0.0
      %250 = vmatprep.subr.mxu0 0.0
      %251 = vmatpush1.msra.mxu0 0.0
      %252 = vmatprep.subr.mxu0 0.0
      %253 = vmatpush1.msra.mxu0 0.0
      %254 = vmatprep.subr.mxu0 0.0
      %255 = vmatpush1.msra.mxu0 0.0
      %256 = vmatprep.subr.mxu0 0.0
      %257 = vmatpush1.msra.mxu0 0.0
      %258 = vmatprep.subr.mxu0 0.0
      %259 = vmatpush1.msra.mxu0 0.0
      %260 = vmatprep.subr.mxu0 0.0
      %261 = vmatpush1.msra.mxu0 0.0
      %262 = vmatprep.subr.mxu0 0.0
      %263 = vmatpush1.msra.mxu0 0.0
      %264 = vmatprep.subr.mxu0 0.0
      %265 = vmatpush1.msra.mxu0 0.0
      %266 = vmatprep.subr.mxu0 0.0
      %267 = vmatpush1.msra.mxu0 0.0
      %268 = vmatprep.subr.mxu0 0.0
      %269 = vmatpush1.msra.mxu0 0.0
      %270 = vmatprep.subr.mxu0 0.0
      %271 = vmatpush1.msra.mxu0 0.0
      %272 = vmatprep.subr.mxu0 0.0
      %273 = vmatpush1.msra.mxu0 0.0
      %274 = vmatprep.subr.mxu0 0.0
      %275 = vmatpush1.msra.mxu0 0.0
      %276 = vmatprep.subr.mxu0 0.0
      %277 = vmatpush1.msra.mxu0 0.0
      %278 = vmatprep.subr.mxu0 0.0
      %279 = vmatpush1.msra.mxu0 0.0
      %280 = vmatprep.subr.mxu0 0.0
      %281 = vmatpush1.msra.mxu0 0.0
      %282 = vmatprep.subr.mxu0 0.0
      %283 = vmatpush1.msra.mxu0 0.0
      %284 = vmatprep.subr.mxu0 0.0
      %285 = vmatpush1.msra.mxu0 0.0
      %286 = vmatprep.subr.mxu0 0.0
      %287 = vmatpush1.msra.mxu0 0.0
      %288 = vmatprep.mubr.f32.mxu0 0.0
      %289 = vmatmul.mubr.f32.gmra.mrb[0].mxu0 %v217
      %v290 = vpop.f32.mrb[0].mxu0
      %v291 = vadd.f32 %v211, %v290
      %v292 = vpop.f32.mrb[0].mxu0
      %v293 = vadd.f32 %v211, %v292
      %294 = vdwg.mxu0
      %295 = vst [vmem:[%s202] sm:$0x7f] %v291
      %296 = vst [vmem:[%s202 + $0x8] sm:$0x7f] %v293
      %v297 = vxor.u32 %v291, 2147483648
      %v298 = vxor.u32 %v293, 2147483648
      %v299 = vmul.f32 %v297, 1.442695
      %v300 = vpow.pop %v299
      %v301 = vmul.f32 %v298, 1.442695
      %v302 = vpow.pop %v301
      %v303 = vadd.f32 %v300, 1.0
      %v304 = vadd.f32 %v302, 1.0
      %v305 = vrcp.pop %v303
      %v306 = vmul.f32 1.0, %v305
      %v307 = vrcp.pop %v304
      %v308 = vmul.f32 1.0, %v307
      %v311 = vcombine.low %v306, %v308
      %v313 = vunpack.c.l.s4 1966171168
      %v314 = vunpack.c.0.s8 %v313
      %v315 = vlaneseq
      %v316 = vshrl.u32 %v315, 7
      %v317 = vsub.s32 %v314, %v316
      %v318 = vrot.slane %v311, %v317
      %v320 = vunpack.c.l.s4 1966171168
      %v321 = vunpack.c.0.s8 %v320
      %v322 = vlaneseq
      %v323 = vshrl.u32 %v322, 7
      %v324 = vsub.s32 %v321, %v323
      %v325 = vrot.slane %v318, %v324
      %v327 = vlaneseq
      %vm328 = vcmp.ge.s32.totalorder %v327, 0
      %vm329 = vcmp.lt.s32.totalorder %v327, 256
      %vm330 = vmand %vm328, %vm329
      %331 = vst.msk [vmem:[%s202] ss:$8 sm:$0x3] %vm330, %v325
      %332 = vst.msk [vmem:[%s202] ss:$8 sm:$0x0] %vm330, %v325
      %s333 = sadd.s32 %s18, %s19
      %s334 = smul.u32 2, %s333
      %p335 = scmp.lt.s32.totalorder %s334, 3
      %s336 = scalar_select %p335, %s334, 3
      %s337 = smul.addr %s336, 8
      %s338 = scalar_lea.vmem %s3, %s337
      // Predicated region
      $region33: #{wrapper_forward.1} parent=31 // pred_check
        %p339 = pneg %p116
      $region34: #{wrapper_forward.1} parent=31 // pred_check_branch
        %341 = sbr.rel (%p339) target = $region36
      $region35: #{wrapper_forward.1} parent=31 // pred_region
        %s342 = sadd.s32 %s18, %s19
        %s343 = smul.u32 2, %s342
      $region36: #{wrapper_forward.1} parent=31 // pred_fallthru
        _
    $region32: #{wrapper_forward.1} parent=5 // pred_fallthru
      _
    %p344 = scmp.le.s32.totalorder 2, %s9
    // Predicated region
    $region37: #{wrapper_forward.1} parent=5 // pred_check
      %p345 = pneg %p344
    $region38: #{wrapper_forward.1} parent=5 // pred_check_branch
      %347 = sbr.rel (%p345) target = $region40
    $region39: #{wrapper_forward.1} parent=5 // pred_region
      %s348 = ssub.s32 %s9, 2
      // Predicated region
      $region41: #{wrapper_forward.1} parent=39 // pred_check
        %p349 = pneg %p122
      $region42: #{wrapper_forward.1} parent=39 // pred_check_branch
        %351 = sbr.rel (%p349) target = $region44
      $region43: #{wrapper_forward.1} parent=39 // pred_region
        %s352 = sadd.s32 %s20, %s21
        %s353 = smul.u32 2, %s352
        %p354 = scmp.lt.s32.totalorder %s353, 3
        %s355 = scalar_select %p354, %s353, 3
        %s356 = smul.addr %s355, 8
        %s357 = scalar_lea.vmem %s3, %s356
      $region44: #{wrapper_forward.1} parent=39 // pred_fallthru
        _
    $region40: #{wrapper_forward.1} parent=5 // pred_fallthru
      _
  $region6: #{wrapper_forward.1} parent=0 // loop_footer
    %s13 = sadd.s32 1, %s9
  $region7: #{wrapper_forward.1} parent=0 // loop_footer_branch
    %8 = sbr.rel target = $region3
  $region8: #{wrapper_forward.1} parent=0 // loop_exit
    _

</llo_original>
